<compile_context>
chip_gen: v6e
topology: v6e:2x2x1
jax: 0.10.0
libtpu: 0.0.40
codegen_flags: <defaults>
</compile_context>

<pallas_src>
import functools
import math

import jax
import jax.numpy as jnp
from jax import lax
from jax.experimental import pallas as pl
from jax.experimental.pallas import tpu as pltpu


# Finite "-inf": exp() underflows to 0 for partially-masked rows, and fully-masked rows
# become uniform instead of NaN (PyTorch's masked_fill_(-inf) would give NaN there).
_NEG_BIG = -0.5 * float(jnp.finfo(jnp.float32).max)


# ----------------------------------------------------------------------------
# Fused kernel body: score = (q/sqrt(dim)) @ k^T; attn = softmax(score);
#                    context = attn @ v.   Everything stays in VMEM.
# ----------------------------------------------------------------------------
def _sdpa_body(q, k, v, mask, ctx_ref, attn_ref, *, inv_sqrt_dim, compute_dtype):
    # q: (bb, tq, d)   k, v: (bb, k_len, d)   mask: (bb, tq, k_len) int8 or None
    # Pre-scale q (bb*tq*d multiplies) rather than the (bb*tq*k_len) score.
    q_scaled = (q * inv_sqrt_dim).astype(compute_dtype)

    # Batched matmul contracting the shared last dim — no materialized transpose.
    score = lax.dot_general(
        q_scaled, k.astype(compute_dtype),
        dimension_numbers=(((2,), (2,)), ((0,), (0,))),
        preferred_element_type=jnp.float32)                     # (bb, tq, k_len) f32

    if mask is not None:
        # masked_fill_ semantics: nonzero mask entries are excluded.
        score = jnp.where(mask != 0, _NEG_BIG, score)

    # Numerically stable softmax in f32.
    m = jnp.max(score, axis=-1, keepdims=True)
    e = jnp.exp(score - m)
    denom = jnp.sum(e, axis=-1, keepdims=True)
    attn = e * pl.reciprocal(denom)                             # exact: rows sum to 1
    attn_ref[...] = attn.astype(attn_ref.dtype)

    ctx = lax.dot_general(
        attn.astype(compute_dtype), v.astype(compute_dtype),
        dimension_numbers=(((2,), (1,)), ((0,), (0,))),
        preferred_element_type=jnp.float32)                     # (bb, tq, d)
    ctx_ref[...] = ctx.astype(ctx_ref.dtype)


def _sdpa_kernel(q_ref, k_ref, v_ref, ctx_ref, attn_ref, *, inv_sqrt_dim, compute_dtype):
    _sdpa_body(q_ref[...], k_ref[...], v_ref[...], None, ctx_ref, attn_ref,
               inv_sqrt_dim=inv_sqrt_dim, compute_dtype=compute_dtype)


def _sdpa_masked_kernel(mask_ref, q_ref, k_ref, v_ref, ctx_ref, attn_ref, *,
                        inv_sqrt_dim, compute_dtype):
    _sdpa_body(q_ref[...], k_ref[...], v_ref[...], mask_ref[...], ctx_ref, attn_ref,
               inv_sqrt_dim=inv_sqrt_dim, compute_dtype=compute_dtype)


# ----------------------------------------------------------------------------
# Tiling heuristics / VMEM budgeting
# ----------------------------------------------------------------------------
def _divisors_desc(n):
    return [d for d in range(n, 0, -1) if n % d == 0]


def _pick_tq(q_len):
    """q tile: <= 256 (MXU M-dim on v6e/v7x); full q_len is always layout-legal."""
    if q_len <= 256:
        return q_len
    for d in _divisors_desc(q_len):
        if d <= 256 and d % 8 == 0:
            return d
    return q_len


def _per_step_vmem_bytes(block_b, *, tq, k_len, d, in_itemsize, out_itemsize, has_mask):
    """Double-buffered pipeline blocks + f32 softmax temporaries."""
    qkv = block_b * (tq * d + 2 * k_len * d) * in_itemsize
    outs = block_b * (tq * d + tq * k_len) * out_itemsize
    msk = block_b * tq * k_len if has_mask else 0
    temps = 3 * block_b * tq * k_len * 4 + block_b * tq * d * 4
    return 2 * (qkv + outs + msk) + temps


def _pick_block_b(b, q_steps, footprint_fn, budget_bytes, min_total_steps=4):
    """Largest divisor of b that fits the VMEM budget, shrunk until the grid has enough
    steps for double-buffering + v7x megacore sharding (when possible)."""
    choice = 1
    for d in _divisors_desc(b):
        if footprint_fn(d) <= budget_bytes:
            choice = d
            break
    while choice > 1 and (b // choice) * q_steps < min_total_steps:
        choice = next(d for d in _divisors_desc(b) if d < choice)
    return choice


# ----------------------------------------------------------------------------
# Wrapper
# ----------------------------------------------------------------------------
def scaled_dot_product_attention(query, key, value, mask=None, *, dim=None,
                                 block_b=None, block_q=None,
                                 compute_dtype=jnp.bfloat16,
                                 vmem_budget_bytes=24 * 1024 * 1024):
    """(context, attn) with context = softmax(q @ k^T / sqrt(dim)) @ v.

    query: (B, q_len, d_model)   key/value: (B, k_len, d_model)
    mask (optional): any array reshapeable to (B, q_len, k_len); nonzero entries masked.
    """
    b, q_len, d_model = query.shape
    k_len = key.shape[1]
    assert value.shape[1] == k_len, "key and value must share their sequence length"
    if dim is None:
        dim = d_model
    inv_sqrt_dim = 1.0 / math.sqrt(dim)

    tq = block_q if block_q is not None else _pick_tq(q_len)
    assert q_len % tq == 0, "block_q must divide q_len"
    q_steps = q_len // tq

    in_itemsize = jnp.dtype(query.dtype).itemsize
    out_itemsize = jnp.dtype(query.dtype).itemsize
    has_mask = mask is not None
    footprint = functools.partial(
        _per_step_vmem_bytes, tq=tq, k_len=k_len, d=d_model,
        in_itemsize=in_itemsize, out_itemsize=out_itemsize, has_mask=has_mask)

    if block_b is None:
        block_b = _pick_block_b(b, q_steps, footprint, vmem_budget_bytes)
    assert b % block_b == 0, "block_b must divide the batch size"
    grid = (b // block_b, q_steps)          # batch first → k/v re-DMA'd only per batch block

    q_spec = pl.BlockSpec((block_b, tq, d_model), lambda i, j: (i, j, 0))
    kv_spec = pl.BlockSpec((block_b, k_len, d_model), lambda i, j: (i, 0, 0))
    ctx_spec = pl.BlockSpec((block_b, tq, d_model), lambda i, j: (i, j, 0))
    attn_spec = pl.BlockSpec((block_b, tq, k_len), lambda i, j: (i, j, 0))

    out_shape = (
        jax.ShapeDtypeStruct((b, q_len, d_model), query.dtype),
        jax.ShapeDtypeStruct((b, q_len, k_len), query.dtype),
    )

    # Size the scoped-VMEM limit to the actual footprint (v5e default is only 16 MiB),
    # but never above v7x's 64 MiB physical VMEM.
    vmem_limit = int(min(64 * 1024 * 1024,
                         max(32 * 1024 * 1024, 2 * footprint(block_b))))
    cparams = pltpu.CompilerParams(
        dimension_semantics=("parallel", "parallel"),
        vmem_limit_bytes=vmem_limit)

    flops = 4 * b * q_len * k_len * d_model
    transcendentals = b * q_len * k_len
    bytes_accessed = ((query.size + key.size + value.size) * in_itemsize
                      + (b * q_len * d_model + b * q_len * k_len) * out_itemsize
                      + (b * q_len * k_len if has_mask else 0))
    cost = pl.CostEstimate(flops=flops, transcendentals=transcendentals,
                           bytes_accessed=bytes_accessed)

    if mask is None:
        kernel = functools.partial(_sdpa_kernel, inv_sqrt_dim=inv_sqrt_dim,
                                   compute_dtype=compute_dtype)
        return pl.pallas_call(
            kernel, out_shape=out_shape, grid=grid,
            in_specs=[q_spec, kv_spec, kv_spec],
            out_specs=(ctx_spec, attn_spec),
            compiler_params=cparams, cost_estimate=cost,
        )(query, key, value)

    # int8 mask: 1 byte/element of HBM DMA + VMEM (mirrors mask.view(score.size())).
    mask = mask.reshape(b, q_len, k_len).astype(jnp.int8)
    mask_spec = pl.BlockSpec((block_b, tq, k_len), lambda i, j: (i, j, 0))
    kernel = functools.partial(_sdpa_masked_kernel, inv_sqrt_dim=inv_sqrt_dim,
                               compute_dtype=compute_dtype)
    return pl.pallas_call(
        kernel, out_shape=out_shape, grid=grid,
        in_specs=[mask_spec, q_spec, kv_spec, kv_spec],
        out_specs=(ctx_spec, attn_spec),
        compiler_params=cparams, cost_estimate=cost,
    )(mask, query, key, value)


# Pure-JAX reference (sanity check for the Pallas path).
def reference(query, key, value, mask=None, *, dim):
    score = jnp.einsum("bqd,bkd->bqk", query, key) / math.sqrt(dim)
    if mask is not None:
        score = jnp.where(mask.reshape(score.shape) != 0, -jnp.inf, score)
    attn = jax.nn.softmax(score, axis=-1)
    context = jnp.einsum("bqk,bkd->bqd", attn, value)
    return context, attn


if __name__ == "__main__":
    B, Q_LEN, K_LEN, D_MODEL = 2, 8, 16, 32

    root = jax.random.PRNGKey(0)
    kq, kk, kv, km = jax.random.split(root, 4)
    query = jax.random.normal(kq, (B, Q_LEN, D_MODEL), jnp.float32)
    key_t = jax.random.normal(kk, (B, K_LEN, D_MODEL), jnp.float32)
    value = jax.random.normal(kv, (B, K_LEN, D_MODEL), jnp.float32)

    fwd = jax.jit(functools.partial(scaled_dot_product_attention, dim=D_MODEL))

    # --- unmasked path ---
    context, attn = fwd(query, key_t, value)
    jax.block_until_ready((context, attn))
    ctx_ref, attn_ref = reference(query, key_t, value, dim=D_MODEL)
    assert context.shape == (B, Q_LEN, D_MODEL)
    assert attn.shape == (B, Q_LEN, K_LEN)
    assert jnp.allclose(context, ctx_ref, rtol=2e-2, atol=2e-2)
    assert jnp.allclose(attn, attn_ref, rtol=2e-2, atol=2e-2)

    # --- masked path (never masks an entire row) ---
    mask = jax.random.uniform(km, (B, Q_LEN, K_LEN)) < 0.3
    mask = mask.at[:, :, 0].set(False)
    ctx_m, attn_m = fwd(query, key_t, value, mask)
    jax.block_until_ready((ctx_m, attn_m))
    ctx_mr, attn_mr = reference(query, key_t, value, mask=mask, dim=D_MODEL)
    assert jnp.allclose(ctx_m, ctx_mr, rtol=2e-2, atol=2e-2)
    assert jnp.allclose(attn_m, attn_mr, rtol=2e-2, atol=2e-2)

    print("KERNEL_OK")
</pallas_src>

<mosaic_0001>
module attributes {stable_mosaic.version = 11 : i64} {
  func.func @_sdpa_kernel(%arg0: i32, %arg1: i32, %arg2: memref<1x8x32xf32, #tpu.memory_space<vmem>>, %arg3: memref<1x16x32xf32, #tpu.memory_space<vmem>>, %arg4: memref<1x16x32xf32, #tpu.memory_space<vmem>>, %arg5: memref<1x8x32xf32, #tpu.memory_space<vmem>>, %arg6: memref<1x8x16xf32, #tpu.memory_space<vmem>>) attributes {dimension_semantics = [#tpu.dimension_semantics<parallel>, #tpu.dimension_semantics<parallel>], iteration_bounds = array<i64: 2, 1>, scalar_prefetch = 0 : i64, scratch_operands = 0 : i64, tpu.core_type = #tpu.core_type<tc>, window_params = [{transform_indices = @transform_0, window_bounds = array<i64: 1, 8, 32>}, {transform_indices = @transform_1, window_bounds = array<i64: 1, 16, 32>}, {transform_indices = @transform_2, window_bounds = array<i64: 1, 16, 32>}, {transform_indices = @transform_3, window_bounds = array<i64: 1, 8, 32>}, {transform_indices = @transform_4, window_bounds = array<i64: 1, 8, 16>}]} {
    %c0 = arith.constant 0 : index
    %c0_0 = arith.constant 0 : index
    %c0_1 = arith.constant 0 : index
    %0 = vector.load %arg2[%c0, %c0_0, %c0_1] : memref<1x8x32xf32, #tpu.memory_space<vmem>>, vector<1x8x32xf32>
    %c0_2 = arith.constant 0 : index
    %c0_3 = arith.constant 0 : index
    %c0_4 = arith.constant 0 : index
    %1 = vector.load %arg3[%c0_2, %c0_3, %c0_4] : memref<1x16x32xf32, #tpu.memory_space<vmem>>, vector<1x16x32xf32>
    %c0_5 = arith.constant 0 : index
    %c0_6 = arith.constant 0 : index
    %c0_7 = arith.constant 0 : index
    %2 = vector.load %arg4[%c0_5, %c0_6, %c0_7] : memref<1x16x32xf32, #tpu.memory_space<vmem>>, vector<1x16x32xf32>
    %cst = arith.constant 0.176776692 : f32
    %3 = vector.broadcast %cst : f32 to vector<1x8x32xf32>
    %4 = arith.mulf %0, %3 : vector<1x8x32xf32>
    %5 = arith.truncf %4 : vector<1x8x32xf32> to vector<1x8x32xbf16>
    %6 = arith.truncf %1 : vector<1x16x32xf32> to vector<1x16x32xbf16>
    %cst_8 = arith.constant dense<0.000000e+00> : vector<1x8x16xf32>
    %7 = tpu.matmul %5, %6, %cst_8 {dimension_numbers = #tpu.dot_dimension_numbers<[2], [2], [1], [1], [0, 0, 0, 1, 1, 1], [0], [0]>} : vector<1x8x32xbf16>, vector<1x16x32xbf16>, vector<1x8x16xf32> -> vector<1x8x16xf32>
    %cst_9 = arith.constant dense<0xFF800000> : vector<1x8xf32>
    %8 = vector.multi_reduction <maximumf>, %7, %cst_9 [2] : vector<1x8x16xf32> to vector<1x8xf32>
    %9 = vector.shape_cast %8 : vector<1x8xf32> to vector<1x8x1xf32>
    %10 = vector.broadcast %9 : vector<1x8x1xf32> to vector<1x8x16xf32>
    %11 = arith.subf %7, %10 : vector<1x8x16xf32>
    %12 = math.exp %11 : vector<1x8x16xf32>
    %cst_10 = arith.constant dense<0.000000e+00> : vector<1x8xf32>
    %13 = vector.multi_reduction <add>, %12, %cst_10 [2] : vector<1x8x16xf32> to vector<1x8xf32>
    %14 = vector.shape_cast %13 : vector<1x8xf32> to vector<1x8x1xf32>
    %15 = tpu.reciprocal %14 : vector<1x8x1xf32> -> vector<1x8x1xf32>
    %16 = vector.broadcast %15 : vector<1x8x1xf32> to vector<1x8x16xf32>
    %17 = arith.mulf %12, %16 : vector<1x8x16xf32>
    %c0_11 = arith.constant 0 : index
    %c0_12 = arith.constant 0 : index
    %c0_13 = arith.constant 0 : index
    %18 = vector.load %arg6[%c0_11, %c0_12, %c0_13] : memref<1x8x16xf32, #tpu.memory_space<vmem>>, vector<1x8x16xf32>
    tpu.vector_store %arg6[%c0_11, %c0_12, %c0_13], %17 {strides = array<i32>} : memref<1x8x16xf32, #tpu.memory_space<vmem>>, vector<1x8x16xf32>,
    %19 = arith.truncf %17 : vector<1x8x16xf32> to vector<1x8x16xbf16>
    %20 = arith.truncf %2 : vector<1x16x32xf32> to vector<1x16x32xbf16>
    %cst_14 = arith.constant dense<0.000000e+00> : vector<1x8x32xf32>
    %21 = tpu.matmul %19, %20, %cst_14 {dimension_numbers = #tpu.dot_dimension_numbers<[2], [1], [1], [2], [0, 0, 0, 1, 1, 2], [0], [0]>} : vector<1x8x16xbf16>, vector<1x16x32xbf16>, vector<1x8x32xf32> -> vector<1x8x32xf32>
    %c0_15 = arith.constant 0 : index
    %c0_16 = arith.constant 0 : index
    %c0_17 = arith.constant 0 : index
    %22 = vector.load %arg5[%c0_15, %c0_16, %c0_17] : memref<1x8x32xf32, #tpu.memory_space<vmem>>, vector<1x8x32xf32>
    tpu.vector_store %arg5[%c0_15, %c0_16, %c0_17], %21 {strides = array<i32>} : memref<1x8x32xf32, #tpu.memory_space<vmem>>, vector<1x8x32xf32>,
    return
  }
  func.func @transform_0(%arg0: i32, %arg1: i32) -> (i32, i32, i32) {
    %c0_i32 = arith.constant 0 : i32
    %c0_i32_0 = arith.constant 0 : i32
    return %arg0, %arg1, %c0_i32 : i32, i32, i32
  }
  func.func @transform_1(%arg0: i32, %arg1: i32) -> (i32, i32, i32) {
    %c0_i32 = arith.constant 0 : i32
    %c0_i32_0 = arith.constant 0 : i32
    %c0_i32_1 = arith.constant 0 : i32
    return %arg0, %c0_i32, %c0_i32_0 : i32, i32, i32
  }
  func.func @transform_2(%arg0: i32, %arg1: i32) -> (i32, i32, i32) {
    %c0_i32 = arith.constant 0 : i32
    %c0_i32_0 = arith.constant 0 : i32
    %c0_i32_1 = arith.constant 0 : i32
    return %arg0, %c0_i32, %c0_i32_0 : i32, i32, i32
  }
  func.func @transform_3(%arg0: i32, %arg1: i32) -> (i32, i32, i32) {
    %c0_i32 = arith.constant 0 : i32
    %c0_i32_0 = arith.constant 0 : i32
    return %arg0, %arg1, %c0_i32 : i32, i32, i32
  }
  func.func @transform_4(%arg0: i32, %arg1: i32) -> (i32, i32, i32) {
    %c0_i32 = arith.constant 0 : i32
    %c0_i32_0 = arith.constant 0 : i32
    return %arg0, %arg1, %c0_i32 : i32, i32, i32
  }
}

</mosaic_0001>

<llo_original>
// kernel: scaled_dot_product_attention.1
$region0: #{scaled_dot_product_attention.1}
  #allocation0 [shape = 'u32[]', space=smem, size = 0x4, offset = 0x4, fixed_abs, tag = 'smem constant byte address 0x4 - core index']
  #allocation1 [shape = 'u32[144,128]{1,0:T(1,128)}', space=vmem, size = 0x12000, scoped, tag = 'internal scratch']
  %s0 = inlined_call_operand.hbm [shape: f32[2,8,32], index: 0, kind: input, shape index: {}]
  %s1 = inlined_call_operand.hbm [shape: f32[2,16,32], index: 1, kind: input, shape index: {}]
  %s2 = inlined_call_operand.hbm [shape: f32[2,16,32], index: 2, kind: input, shape index: {}]
  %s3 = inlined_call_operand.hbm [shape: f32[2,8,32], index: 3, kind: output, shape index: {0}]
  %s4 = inlined_call_operand.hbm [shape: f32[2,8,16], index: 4, kind: output, shape index: {1}]
  %5 = xla_tuple %s3, %s4
  %s6 = sld [smem:[#allocation0]]
  $region65: #{scaled_dot_product_attention.1} parent=0
    _
  %s8 = ssub.s32 1, %s6
  %s9 = scalar_select 0, %s8, %s6
  $region1: #{scaled_dot_product_attention.1} parent=0
    #allocation2 [shape = 'u8[8192]{0}', space=vmem, size = 0x2000, scoped, tag = 'input window, operand 0']
    #allocation3 [shape = 's32[2]{0}', space=sflag, size = 0x8, scoped, tag = 'scoped memory for scaled_dot_product_attention.1']
    #allocation4 [shape = 's32[2]{0}', space=sflag, size = 0x8, scoped, tag = 'scoped memory for scaled_dot_product_attention.1']
    #allocation5 [shape = 'u8[16384]{0}', space=vmem, size = 0x4000, scoped, tag = 'input window, operand 1']
    #allocation6 [shape = 's32[2]{0}', space=sflag, size = 0x8, scoped, tag = 'scoped memory for scaled_dot_product_attention.1']
    #allocation7 [shape = 'u8[16384]{0}', space=vmem, size = 0x4000, scoped, tag = 'input window, operand 2']
    #allocation8 [shape = 'u8[8192]{0}', space=vmem, size = 0x2000, scoped, tag = 'output window, operand 0']
    #allocation9 [shape = 'u8[8192]{0}', space=vmem, size = 0x2000, scoped, tag = 'output window, operand 1']
    #allocation10 [shape = 's32[2]{0}', space=sflag, size = 0x8, scoped, tag = 'scoped memory for scaled_dot_product_attention.1']
    %10 = vsyncpa [#allocation3], 0
    %s11 = scalar_lea.sflag [#allocation3], 1
    %12 = vsyncpa %s11, 0
    %13 = vsyncpa [#allocation6], 0
    %s14 = scalar_lea.sflag [#allocation6], 1
    %15 = vsyncpa %s14, 0
    %16 = vsyncpa [#allocation4], 0
    %s17 = scalar_lea.sflag [#allocation4], 1
    %18 = vsyncpa %s17, 0
    %19 = vsyncpa [#allocation10], 0
    %s20 = scalar_lea.sflag [#allocation10], 1
    %21 = vsyncpa %s20, 0
    loop: start=0, step=1, limit=4
    $region2: #{scaled_dot_product_attention.1} parent=1 // loop_pre_header
      _
    $region3: #{scaled_dot_product_attention.1} parent=1 // loop_header
      %s23 = sphi 0, %s27
      %p24 = scmp.ge.s32.totalorder %s23, 4
      %s30 = sphi 0, %s42
      %s31 = sphi 0, %s38
      %s32 = sphi 0, %s30
      %s33 = sphi 0, %s31
      %s34 = sphi 0, %s32
      %s35 = sphi 0, %s33
      %s47 = sphi 0, %s49
      %s50 = sphi 0, %s47
      %s51 = sphi 0, %s50
      %s67 = sphi 0, %s51
      %s73 = sphi 0, %s75
      %s76 = sphi 0, %s73
      %s77 = sphi 0, %s76
      %s93 = sphi 0, %s77
      %s99 = sphi 0, %s101
      %s102 = sphi 0, %s99
      %s103 = sphi 0, %s102
      %s119 = sphi 0, %s103
      %s127 = sphi 0, %s129
      %s130 = sphi 0, %s127
      %s131 = sphi 0, %s130
      %s147 = sphi 0, %s131
      %s155 = sphi 0, %s157
      %s158 = sphi 0, %s155
      %s159 = sphi 0, %s158
      %s175 = sphi 0, %s159
    $region4: #{scaled_dot_product_attention.1} parent=1 // loop_header_branch
      %26 = sbr.rel (%p24) target = $region8
    $region5: #{scaled_dot_product_attention.1} parent=1 // loop_body
      %s28 = ssub.s32 %s23, 1
      %s29 = ssub.s32 %s23, 2
      %s36 = sadd.s32 1, %s31
      %p37 = scmp.ge.s32.totalorder %s36, 1
      %s38 = scalar_select %p37, 0, %s36
      %s39 = sadd.s32 1, %s30
      %s40 = scalar_select %p37, %s39, %s30
      %p41 = scmp.ge.s32.totalorder %s40, 2
      %s42 = scalar_select %p41, 0, %s40
      %s43 = ssub.s32 %s30, %s42
      %s44 = ssub.s32 %s31, %s38
      %s45 = sor.u32 %s43, %s44
      %p46 = scmp.eq.s32.totalorder %s45, 0
      %s48 = sadd.s32 %s47, 1
      %s49 = scalar_select %p46, %s47, %s48
      %p52 = pneg %p46
      %p53 = scmp.eq.s32.totalorder %s23, 1
      %p54 = por %p52, %p53
      %p55 = scmp.ne.s32.totalorder %s47, %s50
      %p56 = scmp.eq.s32.totalorder %s23, 0
      %p57 = por %p55, %p56
      %p58 = scmp.ne.s32.totalorder %s47, %s50
      %p59 = scmp.eq.s32.totalorder %s28, 1
      %p60 = por %p58, %p59
      %p61 = scmp.ne.s32.totalorder %s50, %s51
      %p62 = scmp.eq.s32.totalorder %s28, 0
      %p63 = por %p61, %p62
      %p64 = scmp.ne.s32.totalorder %s50, %s51
      %p65 = scmp.eq.s32.totalorder %s29, 1
      %p66 = por %p64, %p65
      %p68 = scmp.ne.s32.totalorder %s51, %s67
      %p69 = scmp.eq.s32.totalorder %s29, 0
      %p70 = por %p68, %p69
      %s71 = ssub.s32 %s30, %s42
      %p72 = scmp.eq.s32.totalorder %s71, 0
      %s74 = sadd.s32 %s73, 1
      %s75 = scalar_select %p72, %s73, %s74
      %p78 = pneg %p72
      %p79 = scmp.eq.s32.totalorder %s23, 1
      %p80 = por %p78, %p79
      %p81 = scmp.ne.s32.totalorder %s73, %s76
      %p82 = scmp.eq.s32.totalorder %s23, 0
      %p83 = por %p81, %p82
      %p84 = scmp.ne.s32.totalorder %s73, %s76
      %p85 = scmp.eq.s32.totalorder %s28, 1
      %p86 = por %p84, %p85
      %p87 = scmp.ne.s32.totalorder %s76, %s77
      %p88 = scmp.eq.s32.totalorder %s28, 0
      %p89 = por %p87, %p88
      %p90 = scmp.ne.s32.totalorder %s76, %s77
      %p91 = scmp.eq.s32.totalorder %s29, 1
      %p92 = por %p90, %p91
      %p94 = scmp.ne.s32.totalorder %s77, %s93
      %p95 = scmp.eq.s32.totalorder %s29, 0
      %p96 = por %p94, %p95
      %s97 = ssub.s32 %s30, %s42
      %p98 = scmp.eq.s32.totalorder %s97, 0
      %s100 = sadd.s32 %s99, 1
      %s101 = scalar_select %p98, %s99, %s100
      %p104 = pneg %p98
      %p105 = scmp.eq.s32.totalorder %s23, 1
      %p106 = por %p104, %p105
      %p107 = scmp.ne.s32.totalorder %s99, %s102
      %p108 = scmp.eq.s32.totalorder %s23, 0
      %p109 = por %p107, %p108
      %p110 = scmp.ne.s32.totalorder %s99, %s102
      %p111 = scmp.eq.s32.totalorder %s28, 1
      %p112 = por %p110, %p111
      %p113 = scmp.ne.s32.totalorder %s102, %s103
      %p114 = scmp.eq.s32.totalorder %s28, 0
      %p115 = por %p113, %p114
      %p116 = scmp.ne.s32.totalorder %s102, %s103
      %p117 = scmp.eq.s32.totalorder %s29, 1
      %p118 = por %p116, %p117
      %p120 = scmp.ne.s32.totalorder %s103, %s119
      %p121 = scmp.eq.s32.totalorder %s29, 0
      %p122 = por %p120, %p121
      %s123 = ssub.s32 %s30, %s42
      %s124 = ssub.s32 %s31, %s38
      %s125 = sor.u32 %s123, %s124
      %p126 = scmp.eq.s32.totalorder %s125, 0
      %s128 = sadd.s32 %s127, 1
      %s129 = scalar_select %p126, %s127, %s128
      %p132 = pneg %p126
      %p133 = scmp.eq.s32.totalorder %s23, 1
      %p134 = por %p132, %p133
      %p135 = scmp.ne.s32.totalorder %s127, %s130
      %p136 = scmp.eq.s32.totalorder %s23, 0
      %p137 = por %p135, %p136
      %p138 = scmp.ne.s32.totalorder %s127, %s130
      %p139 = scmp.eq.s32.totalorder %s28, 1
      %p140 = por %p138, %p139
      %p141 = scmp.ne.s32.totalorder %s130, %s131
      %p142 = scmp.eq.s32.totalorder %s28, 0
      %p143 = por %p141, %p142
      %p144 = scmp.ne.s32.totalorder %s130, %s131
      %p145 = scmp.eq.s32.totalorder %s29, 1
      %p146 = por %p144, %p145
      %p148 = scmp.ne.s32.totalorder %s131, %s147
      %p149 = scmp.eq.s32.totalorder %s29, 0
      %p150 = por %p148, %p149
      %s151 = ssub.s32 %s30, %s42
      %s152 = ssub.s32 %s31, %s38
      %s153 = sor.u32 %s151, %s152
      %p154 = scmp.eq.s32.totalorder %s153, 0
      %s156 = sadd.s32 %s155, 1
      %s157 = scalar_select %p154, %s155, %s156
      %p160 = pneg %p154
      %p161 = scmp.eq.s32.totalorder %s23, 1
      %p162 = por %p160, %p161
      %p163 = scmp.ne.s32.totalorder %s155, %s158
      %p164 = scmp.eq.s32.totalorder %s23, 0
      %p165 = por %p163, %p164
      %p166 = scmp.ne.s32.totalorder %s155, %s158
      %p167 = scmp.eq.s32.totalorder %s28, 1
      %p168 = por %p166, %p167
      %p169 = scmp.ne.s32.totalorder %s158, %s159
      %p170 = scmp.eq.s32.totalorder %s28, 0
      %p171 = por %p169, %p170
      %p172 = scmp.ne.s32.totalorder %s158, %s159
      %p173 = scmp.eq.s32.totalorder %s29, 1
      %p174 = por %p172, %p173
      %p176 = scmp.ne.s32.totalorder %s159, %s175
      %p177 = scmp.eq.s32.totalorder %s29, 0
      %p178 = por %p176, %p177
      %p179 = scmp.le.s32.totalorder 1, %s23
      %p180 = scmp.lt.s32.totalorder %s23, 3
      %p181 = pnand %p179, %p180
      %p182 = pneg %p181
      // Predicated region
      $region9: #{scaled_dot_product_attention.1} parent=5 // pred_check
        _
      $region10: #{scaled_dot_product_attention.1} parent=5 // pred_check_branch
        %184 = sbr.rel (%p181) target = $region12
      $region11: #{scaled_dot_product_attention.1} parent=5 // pred_region
        %s185 = ssub.s32 %s23, 1
      $region12: #{scaled_dot_product_attention.1} parent=5 // pred_fallthru
        _
      %p186 = scmp.lt.s32.totalorder %s23, 2
      // Predicated region
      $region13: #{scaled_dot_product_attention.1} parent=5 // pred_check
        %p187 = pneg %p186
      $region14: #{scaled_dot_product_attention.1} parent=5 // pred_check_branch
        %189 = sbr.rel (%p187) target = $region16
      $region15: #{scaled_dot_product_attention.1} parent=5 // pred_region
        // Predicated region
        $region17: #{scaled_dot_product_attention.1} parent=15 // pred_check
          %p190 = pneg %p57
        $region18: #{scaled_dot_product_attention.1} parent=15 // pred_check_branch
          %192 = sbr.rel (%p190) target = $region20
        $region19: #{scaled_dot_product_attention.1} parent=15 // pred_region
          %s193 = sand.u32 %s47, 1
          %s194 = scalar_lea.sflag [#allocation3], %s193
          %s195 = sand.u32 %s47, 1
          %s196 = smul.addr %s195, 8
          %s197 = scalar_lea.vmem [#allocation2], %s196
          %s199 = ssub.s32 128, 128
          %200 = vsyncadd %s194, %s199
          %s201 = sadd.s32 %s31, %s30
          %s202 = smul.addr %s201, 128
          %s203 = scalar_lea.hbm %s0, %s202
          %s205 = sshll.u32 %s197, 4
          %s206 = int_to_ptr.vmem [resolvable:$true] %s205
          %208 = dma.hbm_to_vmem [thread:$0]  %s203, 128, %s206, %s194
        $region20: #{scaled_dot_product_attention.1} parent=15 // pred_fallthru
          _
        // Predicated region
        $region21: #{scaled_dot_product_attention.1} parent=15 // pred_check
          %p209 = pneg %p83
        $region22: #{scaled_dot_product_attention.1} parent=15 // pred_check_branch
          %211 = sbr.rel (%p209) target = $region24
        $region23: #{scaled_dot_product_attention.1} parent=15 // pred_region
          %s212 = sand.u32 %s23, 1
          %s213 = scalar_lea.sflag [#allocation6], %s212
          %s214 = sand.u32 %s73, 1
          %s215 = smul.addr %s214, 16
          %s216 = scalar_lea.vmem [#allocation5], %s215
          %s218 = ssub.s32 256, 256
          %219 = vsyncadd %s213, %s218
          %s220 = smul.addr %s30, 2
          %s221 = smul.addr %s220, 128
          %s222 = scalar_lea.hbm %s1, %s221
          %s223 = sshll.u32 %s216, 4
          %s224 = int_to_ptr.vmem [resolvable:$true] %s223
          %229 = dma.hbm_to_vmem [thread:$0]  %s222, 256, %s224, %s213, 128, 128, 8
        $region24: #{scaled_dot_product_attention.1} parent=15 // pred_fallthru
          _
        // Predicated region
        $region25: #{scaled_dot_product_attention.1} parent=15 // pred_check
          %p230 = pneg %p109
        $region26: #{scaled_dot_product_attention.1} parent=15 // pred_check_branch
          %232 = sbr.rel (%p230) target = $region28
        $region27: #{scaled_dot_product_attention.1} parent=15 // pred_region
          %s233 = sand.u32 %s23, 1
          %s234 = scalar_lea.sflag [#allocation6], %s233
          %s235 = sand.u32 %s99, 1
          %s236 = smul.addr %s235, 16
          %s237 = scalar_lea.vmem [#allocation7], %s236
          %s239 = ssub.s32 256, 256
          %240 = vsyncadd %s234, %s239
          %s241 = smul.addr %s30, 2
          %s242 = smul.addr %s241, 128
          %s243 = scalar_lea.hbm %s2, %s242
          %s244 = sshll.u32 %s237, 4
          %s245 = int_to_ptr.vmem [resolvable:$true] %s244
          %250 = dma.hbm_to_vmem [thread:$0]  %s243, 256, %s245, %s234, 128, 128, 8
        $region28: #{scaled_dot_product_attention.1} parent=15 // pred_fallthru
          _
      $region16: #{scaled_dot_product_attention.1} parent=5 // pred_fallthru
        _
      %p251 = scmp.le.s32.totalorder 1, %s23
      %p252 = scmp.lt.s32.totalorder %s23, 3
      %p253 = pnand %p251, %p252
      %p254 = pneg %p253
      // Predicated region
      $region29: #{scaled_dot_product_attention.1} parent=5 // pred_check
        _
      $region30: #{scaled_dot_product_attention.1} parent=5 // pred_check_branch
        %256 = sbr.rel (%p253) target = $region32
      $region31: #{scaled_dot_product_attention.1} parent=5 // pred_region
        %s257 = ssub.s32 %s23, 1
        %s258 = sand.u32 %s50, 1
        %s259 = scalar_lea.sflag [#allocation3], %s258
        %s260 = sand.u32 %s50, 1
        %s261 = smul.addr %s260, 8
        %s262 = scalar_lea.vmem [#allocation2], %s261
        // Predicated region
        $region33: #{scaled_dot_product_attention.1} parent=31 // pred_check
          %p263 = pneg %p63
        $region34: #{scaled_dot_product_attention.1} parent=31 // pred_check_branch
          %265 = sbr.rel (%p263) target = $region36
        $region35: #{scaled_dot_product_attention.1} parent=31 // pred_region
          %266 = dma.done %s259, 128
        $region36: #{scaled_dot_product_attention.1} parent=31 // pred_fallthru
          _
        %s267 = sand.u32 %s28, 1
        %s268 = scalar_lea.sflag [#allocation6], %s267
        %s269 = sand.u32 %s76, 1
        %s270 = smul.addr %s269, 16
        %s271 = scalar_lea.vmem [#allocation5], %s270
        // Predicated region
        $region37: #{scaled_dot_product_attention.1} parent=31 // pred_check
          %p272 = pneg %p89
        $region38: #{scaled_dot_product_attention.1} parent=31 // pred_check_branch
          %274 = sbr.rel (%p272) target = $region40
        $region39: #{scaled_dot_product_attention.1} parent=31 // pred_region
          %275 = dma.done %s268, 256
        $region40: #{scaled_dot_product_attention.1} parent=31 // pred_fallthru
          _
        %s276 = sand.u32 %s28, 1
        %s277 = scalar_lea.sflag [#allocation6], %s276
        %s278 = sand.u32 %s102, 1
        %s279 = smul.addr %s278, 16
        %s280 = scalar_lea.vmem [#allocation7], %s279
        // Predicated region
        $region41: #{scaled_dot_product_attention.1} parent=31 // pred_check
          %p281 = pneg %p115
        $region42: #{scaled_dot_product_attention.1} parent=31 // pred_check_branch
          %283 = sbr.rel (%p281) target = $region44
        $region43: #{scaled_dot_product_attention.1} parent=31 // pred_region
          %284 = dma.done %s277, 256
        $region44: #{scaled_dot_product_attention.1} parent=31 // pred_fallthru
          _
        %s285 = sand.u32 %s50, 1
        %s286 = scalar_lea.sflag [#allocation3], %s285
        %s287 = sand.u32 %s50, 1
        %s288 = smul.addr %s287, 8
        %s289 = scalar_lea.vmem [#allocation2], %s288
        %p290 = pneg %p63
        %p291 = pneg %p60
        %s292 = sand.u32 %s28, 1
        %s293 = scalar_lea.sflag [#allocation6], %s292
        %s294 = sand.u32 %s76, 1
        %s295 = smul.addr %s294, 16
        %s296 = scalar_lea.vmem [#allocation5], %s295
        %p297 = pneg %p89
        %p298 = pneg %p86
        %s299 = sand.u32 %s28, 1
        %s300 = scalar_lea.sflag [#allocation6], %s299
        %s301 = sand.u32 %s102, 1
        %s302 = smul.addr %s301, 16
        %s303 = scalar_lea.vmem [#allocation7], %s302
        %p304 = pneg %p115
        %p305 = pneg %p112
        %p306 = pneg %p143
        %p307 = pneg %p140
        %s308 = sand.u32 %s130, 1
        %s309 = scalar_lea.sflag [#allocation4], %s308
        %s310 = sand.u32 %s130, 1
        %s311 = smul.addr %s310, 8
        %s312 = scalar_lea.vmem [#allocation8], %s311
        %p313 = pneg %p171
        %p314 = pneg %p168
        %s315 = sand.u32 %s158, 1
        %s316 = scalar_lea.sflag [#allocation10], %s315
        %s317 = sand.u32 %s158, 1
        %s318 = smul.addr %s317, 8
        %s319 = scalar_lea.vmem [#allocation9], %s318
        %v321 = vld [vmem:[%s262] sm:$0xff]
        %v322 = vld [vmem:[%s271] sm:$0xff]
        %v323 = vld [vmem:[%s271 + $0x8] sm:$0xff]
        %v324 = vld [vmem:[%s280] sm:$0xff]
        %v325 = vld [vmem:[%s280 + $0x8] sm:$0xff]
        %v326 = vmul.f32 %v321, 0.17677669
        %v327 = vpack.c.bf16 %v326, %v326
        %v328 = vpack.c.bf16 %v323, %v322
        %vm329 = vcmask 261120
        %v331 = vsel %vm329, %v327, 0
        %v334 = vsel %vm329, %v328, 0
        %336 = vmatprep.subr.bf16.mxu0 0
        %337 = vmatpush1.bf16.xpose.msra.mxu0 0
        %338 = vmatprep.subr.bf16.mxu0 0
        %339 = vmatpush1.bf16.xpose.msra.mxu0 0
        %340 = vmatprep.subr.bf16.mxu0 0
        %341 = vmatpush1.bf16.xpose.msra.mxu0 0
        %342 = vmatprep.subr.bf16.mxu0 0
        %343 = vmatpush1.bf16.xpose.msra.mxu0 0
        %344 = vmatprep.subr.bf16.mxu0 0
        %345 = vmatpush1.bf16.xpose.msra.mxu0 0
        %346 = vmatprep.subr.bf16.mxu0 0
        %347 = vmatpush1.bf16.xpose.msra.mxu0 0
        %348 = vmatprep.subr.bf16.mxu0 0
        %349 = vmatpush1.bf16.xpose.msra.mxu0 0
        %350 = vmatprep.subr.bf16.mxu0 0
        %351 = vmatpush1.bf16.xpose.msra.mxu0 %v334
        %352 = vmatprep.subr.bf16.mxu0 0
        %353 = vmatpush2.bf16.xpose.msra.mxu0 0
        %354 = vmatprep.subr.bf16.mxu0 0
        %355 = vmatpush2.bf16.xpose.msra.mxu0 0
        %356 = vmatprep.subr.bf16.mxu0 0
        %357 = vmatpush2.bf16.xpose.msra.mxu0 0
        %358 = vmatprep.subr.bf16.mxu0 0
        %359 = vmatpush2.bf16.xpose.msra.mxu0 0
        %360 = vmatprep.subr.bf16.mxu0 0
        %361 = vmatpush2.bf16.xpose.msra.mxu0 0
        %362 = vmatprep.subr.bf16.mxu0 0
        %363 = vmatpush2.bf16.xpose.msra.mxu0 0
        %364 = vmatprep.subr.bf16.mxu0 0
        %365 = vmatpush2.bf16.xpose.msra.mxu0 0
        %366 = vmatprep.subr.bf16.mxu0 0
        %367 = vmatpush2.bf16.xpose.msra.mxu0 0
        %368 = vmatprep.mubr.bf16.mxu0 0
        %369 = vmatmul.mubr.bf16.gmra.mxu0 %v331
        %v370 = vpop.f32.mrf.mxu0
        %v371 = vadd.f32 0.0, %v370
        %v372 = vpop.f32.mrf.mxu0
        %v373 = vpop.f32.mrf.mxu0
        %v374 = vpop.f32.mrf.mxu0
        %375 = vdwg.mxu0
        %vm376 = vcmask 130048
        %v377 = vsel %vm376, %v371, -inf
        %378 = vmax.xlane.f32.xlu0 %v377
        %v379 = vpop.xlane.xlu0 %378
        %v380 = vsub.f32 %v371, %v379
        %v381 = vmul.f32 %v380, 1.442695
        %v382 = vpow.pop %v381
        %v383 = vsel %vm376, %v382, 0.0
        %384 = vadd.xlane.f32.xlu0 %v383
        %v385 = vpop.xlane.xlu0 %384
        %v386 = vrcp.pop %v385
        %v387 = vmul.f32 %v382, %v386
        %388 = vst.msk [vmem:[%s319] sm:$0xff] %vm376, %v387
        %v389 = vpack.c.bf16 %v387, %v387
        %v390 = vpack.c.bf16 %v325, %v324
        %v392 = vsel %vm376, %v389, 0
        %394 = vmatprep.subr.bf16.mxu0 0
        %395 = vmatpush1.bf16.msra.mxu0 0
        %396 = vmatprep.subr.bf16.mxu0 0
        %397 = vmatpush1.bf16.msra.mxu0 0
        %398 = vmatprep.subr.bf16.mxu0 0
        %399 = vmatpush1.bf16.msra.mxu0 0
        %400 = vmatprep.subr.bf16.mxu0 0
        %401 = vmatpush1.bf16.msra.mxu0 0
        %402 = vmatprep.subr.bf16.mxu0 0
        %403 = vmatpush1.bf16.msra.mxu0 0
        %404 = vmatprep.subr.bf16.mxu0 0
        %405 = vmatpush1.bf16.msra.mxu0 0
        %406 = vmatprep.subr.bf16.mxu0 0
        %407 = vmatpush1.bf16.msra.mxu0 0
        %408 = vmatprep.subr.bf16.mxu0 0
        %409 = vmatpush1.bf16.msra.mxu0 %v390
        %410 = vmatprep.subr.bf16.mxu0 0
        %411 = vmatpush2.bf16.msra.mxu0 0
        %412 = vmatprep.subr.bf16.mxu0 0
        %413 = vmatpush2.bf16.msra.mxu0 0
        %414 = vmatprep.subr.bf16.mxu0 0
        %415 = vmatpush2.bf16.msra.mxu0 0
        %416 = vmatprep.subr.bf16.mxu0 0
        %417 = vmatpush2.bf16.msra.mxu0 0
        %418 = vmatprep.subr.bf16.mxu0 0
        %419 = vmatpush2.bf16.msra.mxu0 0
        %420 = vmatprep.subr.bf16.mxu0 0
        %421 = vmatpush2.bf16.msra.mxu0 0
        %422 = vmatprep.subr.bf16.mxu0 0
        %423 = vmatpush2.bf16.msra.mxu0 0
        %424 = vmatprep.subr.bf16.mxu0 0
        %425 = vmatpush2.bf16.msra.mxu0 0
        %426 = vmatprep.mubr.bf16.mxu0 0
        %427 = vmatmul.mubr.bf16.gmra.mxu0 %v392
        %v428 = vpop.f32.mrf.mxu0
        %v429 = vadd.f32 0.0, %v428
        %v430 = vpop.f32.mrf.mxu0
        %v431 = vpop.f32.mrf.mxu0
        %v432 = vpop.f32.mrf.mxu0
        %433 = vdwg.mxu0
        %434 = vst.msk [vmem:[%s312] sm:$0xff] %vm329, %v429
        %s435 = sand.u32 %s130, 1
        %s436 = scalar_lea.sflag [#allocation4], %s435
        %s437 = sand.u32 %s130, 1
        %s438 = smul.addr %s437, 8
        %s439 = scalar_lea.vmem [#allocation8], %s438
        %s440 = sand.u32 %s158, 1
        %s441 = scalar_lea.sflag [#allocation10], %s440
        %s442 = sand.u32 %s158, 1
        %s443 = smul.addr %s442, 8
        %s444 = scalar_lea.vmem [#allocation9], %s443
        // Predicated region
        $region45: #{scaled_dot_product_attention.1} parent=31 // pred_check
          %p445 = pneg %p140
        $region46: #{scaled_dot_product_attention.1} parent=31 // pred_check_branch
          %447 = sbr.rel (%p445) target = $region48
        $region47: #{scaled_dot_product_attention.1} parent=31 // pred_region
          %s449 = ssub.s32 128, 128
          %450 = vsyncadd %s436, %s449
          %s451 = sadd.s32 %s33, %s32
          %s452 = smul.addr %s451, 128
          %s453 = scalar_lea.hbm %s3, %s452
          %s455 = sshll.u32 %s439, 4
          %s456 = int_to_ptr.vmem [resolvable:$true] %s455
          %458 = dma.vmem_to_hbm [thread:$0]  %s456, 128, %s453, %s436
        $region48: #{scaled_dot_product_attention.1} parent=31 // pred_fallthru
          _
        // Predicated region
        $region49: #{scaled_dot_product_attention.1} parent=31 // pred_check
          %p459 = pneg %p168
        $region50: #{scaled_dot_product_attention.1} parent=31 // pred_check_branch
          %461 = sbr.rel (%p459) target = $region52
        $region51: #{scaled_dot_product_attention.1} parent=31 // pred_region
          %s463 = ssub.s32 128, 128
          %464 = vsyncadd %s441, %s463
          %s465 = sadd.s32 %s33, %s32
          %s466 = smul.addr %s465, 128
          %s467 = scalar_lea.hbm %s4, %s466
          %s469 = sshll.u32 %s444, 4
          %s470 = int_to_ptr.vmem [resolvable:$true] %s469
          %472 = dma.vmem_to_hbm [thread:$0]  %s470, 128, %s467, %s441
        $region52: #{scaled_dot_product_attention.1} parent=31 // pred_fallthru
          _
      $region32: #{scaled_dot_product_attention.1} parent=5 // pred_fallthru
        _
      %p473 = scmp.le.s32.totalorder 2, %s23
      // Predicated region
      $region53: #{scaled_dot_product_attention.1} parent=5 // pred_check
        %p474 = pneg %p473
      $region54: #{scaled_dot_product_attention.1} parent=5 // pred_check_branch
        %476 = sbr.rel (%p474) target = $region56
      $region55: #{scaled_dot_product_attention.1} parent=5 // pred_region
        %s477 = ssub.s32 %s23, 2
        // Predicated region
        $region57: #{scaled_dot_product_attention.1} parent=55 // pred_check
          %p478 = pneg %p146
        $region58: #{scaled_dot_product_attention.1} parent=55 // pred_check_branch
          %480 = sbr.rel (%p478) target = $region60
        $region59: #{scaled_dot_product_attention.1} parent=55 // pred_region
          %s481 = sand.u32 %s131, 1
          %s482 = scalar_lea.sflag [#allocation4], %s481
          %s483 = sand.u32 %s131, 1
          %s484 = smul.addr %s483, 8
          %s485 = scalar_lea.vmem [#allocation8], %s484
          %486 = dma.done %s482, 128
        $region60: #{scaled_dot_product_attention.1} parent=55 // pred_fallthru
          _
        // Predicated region
        $region61: #{scaled_dot_product_attention.1} parent=55 // pred_check
          %p487 = pneg %p174
        $region62: #{scaled_dot_product_attention.1} parent=55 // pred_check_branch
          %489 = sbr.rel (%p487) target = $region64
        $region63: #{scaled_dot_product_attention.1} parent=55 // pred_region
          %s490 = sand.u32 %s159, 1
          %s491 = scalar_lea.sflag [#allocation10], %s490
          %s492 = sand.u32 %s159, 1
          %s493 = smul.addr %s492, 8
          %s494 = scalar_lea.vmem [#allocation9], %s493
          %495 = dma.done %s491, 128
        $region64: #{scaled_dot_product_attention.1} parent=55 // pred_fallthru
          _
      $region56: #{scaled_dot_product_attention.1} parent=5 // pred_fallthru
        _
    $region6: #{scaled_dot_product_attention.1} parent=1 // loop_footer
      %s27 = sadd.s32 1, %s23
    $region7: #{scaled_dot_product_attention.1} parent=1 // loop_footer_branch
      %22 = sbr.rel target = $region3
    $region8: #{scaled_dot_product_attention.1} parent=1 // loop_exit
      _
    %496 = vsyncpa [#allocation3], 1
    %s497 = scalar_lea.sflag [#allocation3], 1
    %498 = vsyncpa %s497, 1
    %499 = vsyncpa [#allocation6], 1
    %s500 = scalar_lea.sflag [#allocation6], 1
    %501 = vsyncpa %s500, 1
    %502 = vsyncpa [#allocation4], 1
    %s503 = scalar_lea.sflag [#allocation4], 1
    %504 = vsyncpa %s503, 1
    %505 = vsyncpa [#allocation10], 1
    %s506 = scalar_lea.sflag [#allocation10], 1
    %507 = vsyncpa %s506, 1

</llo_original>
